<compile_context>
chip_gen: v6e
topology: v6e:2x2x1
jax: 0.10.0
libtpu: 0.0.40
codegen_flags: <defaults>
</compile_context>

<pallas_src>
import jax
import jax.numpy as jnp
from jax import lax
from jax.experimental import pallas as pl
from jax.experimental.pallas import tpu as pltpu  # noqa: F401  (TPU backend assumed)

NUM_ACTIONS = 4  # from default_config().num_actions and the hard-coded tile(4, 1)


def _q_kernel(feat_ref, w_ref, q_ref):
    # feat_ref: [1, F]   w_ref: [G, F]   q_ref: [G, NUM_ACTIONS]
    f = feat_ref[...]                                   # [1, F]
    w = w_ref[...]                                      # [G, F]

    # qv[g] = sum_f w[g, f] * f[f]  -- VPU elementwise mul + cross-lane reduce.
    # At these sizes this beats an MXU matmul (which would also force an RHS
    # transpose), and it is the preferred formulation on v5e.
    qv = jnp.sum(w * f, axis=-1, keepdims=True)         # [G, 1] f32

    # scale row [1, 1, 5, 1] built from a tiny [1, 4] iota (single-vreg, free).
    col = lax.broadcasted_iota(jnp.int32, (1, NUM_ACTIONS), 1)
    scale_row = jnp.where(col == 2, 5.0, 1.0).astype(jnp.float32)   # [1, 4]

    q_ref[...] = (qv * scale_row).astype(q_ref.dtype)   # [G, 4]


def stub_feature_goal_weight_forward(features, policy_goal_position, env_goal_weights):
    """features: [1, F] f32, env_goal_weights: [G, F] f32."""
    assert features.ndim == 2 and features.shape[0] == 1
    G, F = env_goal_weights.shape
    assert features.shape[1] == F

    q = pl.pallas_call(
        _q_kernel,
        out_shape=jax.ShapeDtypeStruct((G, NUM_ACTIONS), jnp.float32),
        in_specs=[
            pl.BlockSpec(features.shape, lambda: (0, 0)),
            pl.BlockSpec(env_goal_weights.shape, lambda: (0, 0)),
        ],
        out_specs=pl.BlockSpec((G, NUM_ACTIONS), lambda: (0, 0)),
    )(features, env_goal_weights)

    # sf is a trivial replicate of `features` with row 2 scaled by 5. Building it
    # in the wrapper avoids a sublane/lane-partial masked store inside the kernel;
    # XLA fuses this broadcast*scale at zero marginal cost.
    row_scale = jnp.ones((NUM_ACTIONS, 1), jnp.float32).at[2, 0].set(5.0)
    sf = (features * row_scale)[None]                    # sf.unsqueeze(0) -> [1, 4, F]

    # TODO(synk): the PyTorch module's print() side-effects are intentionally omitted.
    return q, sf, env_goal_weights, features


if __name__ == "__main__":
    key = jax.random.PRNGKey(0)
    k1, k2, k3 = jax.random.split(key, 3)

    F = 8   # features size (features_size=None in config; small synthetic F)
    G = 3   # number of env goal weight vectors

    features = jax.random.normal(k1, (1, F), dtype=jnp.float32)
    policy_goal_position = jax.random.normal(k2, (2,), dtype=jnp.float32)  # goal_size=2 (unused)
    env_goal_weights = jax.random.normal(k3, (G, F), dtype=jnp.float32)

    q, sf, w_out, feat_out = stub_feature_goal_weight_forward(
        features, policy_goal_position, env_goal_weights)
    jax.block_until_ready((q, sf, w_out, feat_out))

    # Pure-JAX reference check of the original PyTorch semantics.
    sf_ref = jnp.tile(features, (NUM_ACTIONS, 1))
    sf_ref = sf_ref.at[2].multiply(5.0)
    sf_ref = sf_ref[None]
    q_ref = jnp.sum(sf_ref * env_goal_weights[:, None, :], axis=2)

    assert q.shape == (G, NUM_ACTIONS)
    assert sf.shape == (1, NUM_ACTIONS, F)
    assert jnp.allclose(q, q_ref, atol=1e-5, rtol=1e-5)
    assert jnp.allclose(sf, sf_ref, atol=1e-6, rtol=1e-6)
    assert jnp.array_equal(w_out, env_goal_weights)
    assert jnp.array_equal(feat_out, features)

    print("KERNEL_OK")
</pallas_src>

<mosaic_0001>
module attributes {stable_mosaic.version = 11 : i64} {
  func.func @_q_kernel(%arg0: memref<1x8xf32, #tpu.memory_space<vmem>>, %arg1: memref<3x8xf32, #tpu.memory_space<vmem>>, %arg2: memref<3x4xf32, #tpu.memory_space<vmem>>) attributes {dimension_semantics = [], scalar_prefetch = 0 : i64, scratch_operands = 0 : i64, tpu.core_type = #tpu.core_type<tc>} {
    %c0 = arith.constant 0 : index
    %c0_0 = arith.constant 0 : index
    %0 = vector.load %arg0[%c0, %c0_0] : memref<1x8xf32, #tpu.memory_space<vmem>>, vector<1x8xf32>
    %c0_1 = arith.constant 0 : index
    %c0_2 = arith.constant 0 : index
    %1 = vector.load %arg1[%c0_1, %c0_2] : memref<3x8xf32, #tpu.memory_space<vmem>>, vector<3x8xf32>
    %2 = vector.broadcast %0 : vector<1x8xf32> to vector<3x8xf32>
    %3 = arith.mulf %1, %2 : vector<3x8xf32>
    %cst = arith.constant dense<0.000000e+00> : vector<3xf32>
    %4 = vector.multi_reduction <add>, %3, %cst [1] : vector<3x8xf32> to vector<3xf32>
    %5 = vector.shape_cast %4 : vector<3xf32> to vector<3x1xf32>
    %6 = tpu.iota {dimensions = array<i32: 1>} : vector<1x4xi32>
    %c2_i32 = arith.constant 2 : i32
    %7 = vector.broadcast %c2_i32 : i32 to vector<1x4xi32>
    %8 = arith.cmpi eq, %6, %7 : vector<1x4xi32>
    %cst_3 = arith.constant 5.000000e+00 : f32
    %cst_4 = arith.constant 1.000000e+00 : f32
    %9 = vector.broadcast %cst_3 : f32 to vector<1x4xf32>
    %10 = vector.broadcast %cst_4 : f32 to vector<1x4xf32>
    %11 = arith.select %8, %9, %10 : vector<1x4xi1>, vector<1x4xf32>
    %12 = vector.broadcast %5 : vector<3x1xf32> to vector<3x4xf32>
    %13 = vector.broadcast %11 : vector<1x4xf32> to vector<3x4xf32>
    %14 = arith.mulf %12, %13 : vector<3x4xf32>
    %c0_5 = arith.constant 0 : index
    %c0_6 = arith.constant 0 : index
    %15 = vector.load %arg2[%c0_5, %c0_6] : memref<3x4xf32, #tpu.memory_space<vmem>>, vector<3x4xf32>
    tpu.vector_store %arg2[%c0_5, %c0_6], %14 {strides = array<i32>} : memref<3x4xf32, #tpu.memory_space<vmem>>, vector<3x4xf32>,
    return
  }
}

</mosaic_0001>

<llo_original>
// kernel: tpu_custom_call.1
$region0: #{tpu_custom_call.1}
  #allocation0 [shape = 'u32[]', space=smem, size = 0x4, offset = 0x4, fixed_abs, tag = 'smem constant byte address 0x4 - core index']
  #allocation1 [shape = 'u32[144,128]{1,0:T(1,128)}', space=vmem, size = 0x12000, scoped, tag = 'internal scratch']
  %s0 = inlined_call_operand.hbm [shape: f32[1,8], index: 0, kind: input, shape index: {}]
  %s1 = inlined_call_operand.hbm [shape: f32[3,8], index: 1, kind: input, shape index: {}]
  %s2 = inlined_call_operand.hbm [shape: f32[3,4], index: 2, kind: output, shape index: {}]
  %s3 = sld [smem:[#allocation0]]
  $region26: #{tpu_custom_call.1} parent=0
    _
  %s5 = ssub.s32 1, %s3
  %s6 = scalar_select 0, %s5, %s3
  $region1: #{tpu_custom_call.1} parent=0
    #allocation2 [shape = 'u8[512]{0}', space=vmem, size = 0x400, scoped, tag = 'input window, operand 0, single buffered']
    #allocation3 [shape = 's32[1]{0}', space=sflag, size = 0x4, scoped, tag = 'scoped memory for tpu_custom_call.1']
    #allocation4 [shape = 's32[1]{0}', space=sflag, size = 0x4, scoped, tag = 'scoped memory for tpu_custom_call.1']
    #allocation5 [shape = 'u8[2048]{0}', space=vmem, size = 0x800, scoped, tag = 'input window, operand 1, single buffered']
    #allocation6 [shape = 's32[1]{0}', space=sflag, size = 0x4, scoped, tag = 'scoped memory for tpu_custom_call.1']
    #allocation7 [shape = 'u8[2048]{0}', space=vmem, size = 0x800, scoped, tag = 'output window, operand 0, single buffered']
    %7 = vsyncpa [#allocation3], 0
    %8 = vsyncpa [#allocation6], 0
    %9 = vsyncpa [#allocation4], 0
    // Predicated region
    $region2: #{tpu_custom_call.1} parent=1 // pred_check
      _
    $region3: #{tpu_custom_call.1} parent=1 // pred_check_branch
      %11 = sbr.rel (0) target = $region5
    $region4: #{tpu_custom_call.1} parent=1 // pred_region
      %s13 = ssub.s32 16, 16
      %14 = vsyncadd [#allocation3], %s13
      %s16 = sshll.u32 [#allocation2], 4
      %s17 = int_to_ptr.vmem [resolvable:$true] %s16
      %19 = dma.hbm_to_vmem [thread:$0]  %s0, 16, %s17, [#allocation3]
    $region5: #{tpu_custom_call.1} parent=1 // pred_fallthru
      _
    // Predicated region
    $region6: #{tpu_custom_call.1} parent=1 // pred_check
      _
    $region7: #{tpu_custom_call.1} parent=1 // pred_check_branch
      %21 = sbr.rel (0) target = $region9
    $region8: #{tpu_custom_call.1} parent=1 // pred_region
      %s23 = ssub.s32 64, 64
      %24 = vsyncadd [#allocation6], %s23
      %s26 = sshll.u32 [#allocation5], 4
      %s27 = int_to_ptr.vmem [resolvable:$true] %s26
      %29 = dma.hbm_to_vmem [thread:$0]  %s1, 64, %s27, [#allocation6]
    $region9: #{tpu_custom_call.1} parent=1 // pred_fallthru
      _
    // Predicated region
    $region10: #{tpu_custom_call.1} parent=1 // pred_check
      _
    $region11: #{tpu_custom_call.1} parent=1 // pred_check_branch
      %31 = sbr.rel (0) target = $region13
    $region12: #{tpu_custom_call.1} parent=1 // pred_region
      %32 = dma.done [#allocation3], 16
    $region13: #{tpu_custom_call.1} parent=1 // pred_fallthru
      _
    // Predicated region
    $region14: #{tpu_custom_call.1} parent=1 // pred_check
      _
    $region15: #{tpu_custom_call.1} parent=1 // pred_check_branch
      %34 = sbr.rel (0) target = $region17
    $region16: #{tpu_custom_call.1} parent=1 // pred_region
      %35 = dma.done [#allocation6], 64
    $region17: #{tpu_custom_call.1} parent=1 // pred_fallthru
      _
    %v36 = vld [vmem:[#allocation2] sm:$0x1]
    %v37 = vld [vmem:[#allocation5] sm:$0x7]
    %v39 = vlaneseq
    %v40 = vshrl.u32 %v39, 7
    %v41 = vsub.s32 0, %v40
    %v42 = vrot.slane %v36, %v41
    %v44 = vmul.f32 %v37, %v42
    %vm45 = vcmask 59392
    %v46 = vsel %vm45, %v44, 0.0
    %47 = vadd.xlane.f32.xlu0 %v46
    %v48 = vpop.xlane.xlu0 %47
    %v49 = vlaneseq
    %v50 = vand.u32 %v49, 127
    %vm51 = vcmp.eq.s32.totalorder %v50, 2
    %v52 = vsel %vm51, 5.0, 1.0
    %v53 = vmul.f32 %v48, %v52
    %vm54 = vcmask 26624
    %55 = vst.msk [vmem:[#allocation7] sm:$0x7] %vm54, %v53
    // Predicated region
    $region18: #{tpu_custom_call.1} parent=1 // pred_check
      _
    $region19: #{tpu_custom_call.1} parent=1 // pred_check_branch
      %57 = sbr.rel (0) target = $region21
    $region20: #{tpu_custom_call.1} parent=1 // pred_region
      %s59 = ssub.s32 64, 64
      %60 = vsyncadd [#allocation4], %s59
      %s62 = sshll.u32 [#allocation7], 4
      %s63 = int_to_ptr.vmem [resolvable:$true] %s62
      %65 = dma.vmem_to_hbm [thread:$0]  %s63, 64, %s2, [#allocation4]
    $region21: #{tpu_custom_call.1} parent=1 // pred_fallthru
      _
    // Predicated region
    $region22: #{tpu_custom_call.1} parent=1 // pred_check
      _
    $region23: #{tpu_custom_call.1} parent=1 // pred_check_branch
      %67 = sbr.rel (0) target = $region25
    $region24: #{tpu_custom_call.1} parent=1 // pred_region
      %68 = dma.done [#allocation4], 64
    $region25: #{tpu_custom_call.1} parent=1 // pred_fallthru
      _
    %69 = vsyncpa [#allocation3], 1
    %70 = vsyncpa [#allocation6], 1
    %71 = vsyncpa [#allocation4], 1

</llo_original>
